<compile_context>
chip_gen: v5e
topology: v5e:2x2
jax: 0.10.0
libtpu: 0.0.40
codegen_flags: <defaults>
</compile_context>

<pallas_src>
import functools

import jax
import jax.numpy as jnp
from jax import lax
from jax.experimental import pallas as pl
from jax.experimental.pallas import tpu as pltpu


_NUM_SPLITS = 2  # leading 'parallel' grid axis; shards rows across the 2 TCs on v7x


def _round_up(x, m):
    return ((x + m - 1) // m) * m


def _vmem_capacity_bytes():
    """Physical VMEM of the current chip generation (conservative fallback)."""
    try:
        info = pltpu.get_tpu_info()
        for attr in ("vmem_capacity_bytes", "vmem_size_bytes", "vmem_bytes"):
            v = getattr(info, attr, None)
            if v:
                return int(v)
    except Exception:
        pass
    return 64 * 1024 * 1024  # v7x per-TC physical VMEM (smallest of v5e/v6e/v7x)


def _choose_block_rows(rows, num_classes, pred_itemsize, vmem_cap):
    """Row-block size sized off the real VMEM capacity.

    Budget covers: double-buffered pred + merged-target input tiles, the
    in-kernel f32 upcast / exp / one-hot (tm, C) intermediates, and a handful
    of (tm, 1) per-row vectors (each lane-padded 1 -> 128)."""
    total_budget = min(int(vmem_cap * 0.45), 40 * 1024 * 1024)
    lane_col = 128 * 4                                      # (tm,1) column padded to 128 lanes
    per_row = (2 * (num_classes * pred_itemsize + lane_col)  # 2x-buffered inputs
               + 6 * num_classes * 4                         # (tm,C) f32 intermediates
               + 8 * lane_col)                               # (tm,1) f32 per-row temps
    tm = max(8, (total_budget // per_row) // 8 * 8)
    tm = min(tm, 2048)          # >=512-row tiles already sit at ~85%+ of HBM roofline
    return min(tm, _round_up(rows, 8))


def _masked_ce_kernel(pred_ref, tgt_ref, loss_ref, cnt_ref, *,
                      blocks_per_split, total_rows):
    s = pl.program_id(0)          # row-split (core) axis
    i = pl.program_id(1)          # row-block axis within the split (reduction)

    @pl.when(i == 0)
    def _init():
        loss_ref[...] = jnp.zeros_like(loss_ref)
        cnt_ref[...] = jnp.zeros_like(cnt_ref)

    p = pred_ref[...].astype(jnp.float32)     # (TM, C); upcast in-kernel only
    t = tgt_ref[...]                          # (TM, 1) int32; -1 == masked-out row

    tm = p.shape[0]
    blk = s * blocks_per_split + i            # un-clamped global row-block index
    local = lax.broadcasted_iota(jnp.int32, (tm, 1), 0)
    in_range = (blk * tm + local) < total_rows           # ragged-tail / redundant-block guard
    valid = jnp.logical_and(t >= 0, in_range)            # (TM, 1) bool

    # Numerically stable cross-entropy; `shifted` reused for the one-hot pick.
    row_max = jnp.max(p, axis=-1, keepdims=True)
    shifted = p - row_max
    sumexp = jnp.sum(jnp.exp(shifted), axis=-1, keepdims=True)
    col = lax.broadcasted_iota(jnp.int32, p.shape, 1)
    picked = jnp.sum(jnp.where(col == t, shifted, 0.0), axis=-1, keepdims=True)
    row_loss = jnp.log(sumexp) - picked                   # (TM, 1)

    # jnp.where (select): NaN/inf logits in masked rows cannot poison the sum.
    loss_ref[...] += jnp.sum(jnp.where(valid, row_loss, 0.0))
    cnt_ref[...] += jnp.sum(valid.astype(jnp.float32))    # exact up to 2^24 valid rows


@jax.jit
def masked_cross_entropy_loss(pred, target, mask):
    """Pallas TPU implementation of MaskedCrossEntropyLoss.forward.

    pred:   (..., C) float logits (native dtype preserved; bf16 stays bf16 in HBM)
    target: (..., 1) integer class ids
    mask:   (..., 1) validity mask (nonzero == valid)
    Returns the mean cross-entropy over valid rows.
    """
    num_classes = pred.shape[-1]
    p2d = pred.reshape(-1, num_classes)                   # no wrapper-side upcast
    rows = p2d.shape[0]

    # Fuse target + mask into one int32 stream: class id if valid, -1 otherwise.
    t2d = target.reshape(rows, 1).astype(jnp.int32)
    m2d = mask.reshape(rows, 1)
    tgt = jnp.where(m2d != 0, t2d, jnp.int32(-1))

    vmem_cap = _vmem_capacity_bytes()
    tm = _choose_block_rows(rows, num_classes, p2d.dtype.itemsize, vmem_cap)
    n_blocks = -(-rows // tm)                             # no padding: ragged tail masked in-kernel
    num_splits = max(1, min(_NUM_SPLITS, n_blocks))
    blocks_per_split = -(-n_blocks // num_splits)
    grid = (num_splits, blocks_per_split)

    def row_block(s, i):
        # Clamp the redundant trailing blocks of the last split to a valid block;
        # the kernel masks them out via the un-clamped global row index.
        return (jnp.minimum(s * blocks_per_split + i, n_blocks - 1), 0)

    kernel = functools.partial(_masked_ce_kernel,
                               blocks_per_split=blocks_per_split,
                               total_rows=rows)

    # TODO(synk): for vocab-scale C (row >= ~0.5 MiB) add an inner C grid axis
    # with online-logsumexp so tm can stay >= 512 rows independently of C.
    loss_p, cnt_p = pl.pallas_call(
        kernel,
        out_shape=(
            jax.ShapeDtypeStruct((num_splits, 8, 128), jnp.float32),
            jax.ShapeDtypeStruct((num_splits, 8, 128), jnp.float32),
        ),
        grid_spec=pltpu.PrefetchScalarGridSpec(
            num_scalar_prefetch=0,
            grid=grid,
            in_specs=[
                pl.BlockSpec((tm, num_classes), row_block),
                pl.BlockSpec((tm, 1), row_block),
            ],
            out_specs=[
                pl.BlockSpec((1, 8, 128), lambda s, i: (s, 0, 0)),
                pl.BlockSpec((1, 8, 128), lambda s, i: (s, 0, 0)),
            ],
        ),
        compiler_params=pltpu.CompilerParams(
            dimension_semantics=("parallel", "arbitrary"),
            vmem_limit_bytes=min(int(vmem_cap * 0.7), 96 * 1024 * 1024),
        ),
    )(p2d, tgt)

    total = jnp.sum(loss_p[:, 0, 0])
    count = jnp.sum(cnt_p[:, 0, 0])
    # count == 0 -> NaN, matching nn.CrossEntropyLoss on an empty selection.
    return total / count


def _reference(pred, target, mask):
    """Pure-JAX reference matching the PyTorch semantics."""
    num_classes = pred.shape[-1]
    p = pred.reshape(-1, num_classes).astype(jnp.float32)
    t = target.reshape(-1).astype(jnp.int32)
    m = mask.reshape(-1) != 0
    logp = jax.nn.log_softmax(p, axis=-1)
    picked = jnp.take_along_axis(logp, t[:, None], axis=-1)[:, 0]
    loss = jnp.where(m, -picked, 0.0)
    return jnp.sum(loss) / jnp.sum(m.astype(jnp.float32))


if __name__ == "__main__":
    key = jax.random.PRNGKey(0)
    k1, k2, k3 = jax.random.split(key, 3)
    # (batch, seq, classes) logits; target / mask carry a trailing singleton dim
    # exactly like the PyTorch module expects before its squeeze.
    B, S, C = 2, 8, 32
    pred = jax.random.normal(k1, (B, S, C), dtype=jnp.float32)
    target = jax.random.randint(k2, (B, S, 1), 0, C, dtype=jnp.int32)
    mask = (jax.random.uniform(k3, (B, S, 1)) > 0.5).astype(jnp.float32)
    mask = mask.at[0, 0, 0].set(1.0)  # guarantee at least one valid row

    out = masked_cross_entropy_loss(pred, target, mask)
    out = jax.block_until_ready(out)

    ref = _reference(pred, target, mask)
    assert jnp.allclose(out, ref, rtol=1e-5, atol=1e-5), (out, ref)
    print("KERNEL_OK")
</pallas_src>

<mosaic_0001>
module attributes {stable_mosaic.version = 11 : i64} {
  func.func @_masked_ce_kernel(%arg0: i32, %arg1: i32, %arg2: memref<16x32xf32, #tpu.memory_space<vmem>>, %arg3: memref<16x1xi32, #tpu.memory_space<vmem>>, %arg4: memref<1x8x128xf32, #tpu.memory_space<vmem>>, %arg5: memref<1x8x128xf32, #tpu.memory_space<vmem>>) attributes {dimension_semantics = [#tpu.dimension_semantics<parallel>, #tpu.dimension_semantics<arbitrary>], iteration_bounds = array<i64: 1, 1>, scalar_prefetch = 0 : i64, scratch_operands = 0 : i64, tpu.core_type = #tpu.core_type<tc>, window_params = [{transform_indices = @transform_0, window_bounds = array<i64: 16, 32>}, {transform_indices = @transform_1, window_bounds = array<i64: 16, 1>}, {transform_indices = @transform_2, window_bounds = array<i64: 1, 8, 128>}, {transform_indices = @transform_3, window_bounds = array<i64: 1, 8, 128>}]} {
    %c0_i32 = arith.constant 0 : i32
    %0 = arith.cmpi eq, %arg1, %c0_i32 : i32
    %1 = arith.extui %0 : i1 to i32
    %c0_i32_0 = arith.constant 0 : i32
    %2 = arith.cmpi ne, %1, %c0_i32_0 : i32
    scf.if %2 {
      %cst_24 = arith.constant 0.000000e+00 : f32
      %52 = vector.broadcast %cst_24 : f32 to vector<1x8x128xf32>
      %c0_25 = arith.constant 0 : index
      %c0_26 = arith.constant 0 : index
      %c0_27 = arith.constant 0 : index
      %53 = vector.load %arg4[%c0_25, %c0_26, %c0_27] : memref<1x8x128xf32, #tpu.memory_space<vmem>>, vector<1x8x128xf32>
      tpu.vector_store %arg4[%c0_25, %c0_26, %c0_27], %52 {strides = array<i32>} : memref<1x8x128xf32, #tpu.memory_space<vmem>>, vector<1x8x128xf32>,
      %cst_28 = arith.constant 0.000000e+00 : f32
      %54 = vector.broadcast %cst_28 : f32 to vector<1x8x128xf32>
      %c0_29 = arith.constant 0 : index
      %c0_30 = arith.constant 0 : index
      %c0_31 = arith.constant 0 : index
      %55 = vector.load %arg5[%c0_29, %c0_30, %c0_31] : memref<1x8x128xf32, #tpu.memory_space<vmem>>, vector<1x8x128xf32>
      tpu.vector_store %arg5[%c0_29, %c0_30, %c0_31], %54 {strides = array<i32>} : memref<1x8x128xf32, #tpu.memory_space<vmem>>, vector<1x8x128xf32>,
    } else {
    }
    %c0 = arith.constant 0 : index
    %c0_1 = arith.constant 0 : index
    %3 = vector.load %arg2[%c0, %c0_1] : memref<16x32xf32, #tpu.memory_space<vmem>>, vector<16x32xf32>
    %c0_2 = arith.constant 0 : index
    %c0_3 = arith.constant 0 : index
    %4 = vector.load %arg3[%c0_2, %c0_3] : memref<16x1xi32, #tpu.memory_space<vmem>>, vector<16x1xi32>
    %c1_i32 = arith.constant 1 : i32
    %5 = arith.muli %arg0, %c1_i32 : i32
    %6 = arith.addi %5, %arg1 : i32
    %7 = tpu.iota {dimensions = array<i32: 0>} : vector<16x1xi32>
    %c16_i32 = arith.constant 16 : i32
    %8 = arith.muli %6, %c16_i32 : i32
    %9 = vector.broadcast %8 : i32 to vector<16x1xi32>
    %10 = arith.addi %9, %7 : vector<16x1xi32>
    %c16_i32_4 = arith.constant 16 : i32
    %11 = vector.broadcast %c16_i32_4 : i32 to vector<16x1xi32>
    %12 = arith.cmpi slt, %10, %11 : vector<16x1xi32>
    %c0_i32_5 = arith.constant 0 : i32
    %13 = vector.broadcast %c0_i32_5 : i32 to vector<16x1xi32>
    %14 = arith.cmpi sge, %4, %13 : vector<16x1xi32>
    %15 = arith.andi %14, %12 : vector<16x1xi1>
    %cst = arith.constant dense<0xFF800000> : vector<16xf32>
    %16 = vector.multi_reduction <maximumf>, %3, %cst [1] : vector<16x32xf32> to vector<16xf32>
    %17 = vector.shape_cast %16 : vector<16xf32> to vector<16x1xf32>
    %18 = vector.broadcast %17 : vector<16x1xf32> to vector<16x32xf32>
    %19 = arith.subf %3, %18 : vector<16x32xf32>
    %20 = math.exp %19 : vector<16x32xf32>
    %cst_6 = arith.constant dense<0.000000e+00> : vector<16xf32>
    %21 = vector.multi_reduction <add>, %20, %cst_6 [1] : vector<16x32xf32> to vector<16xf32>
    %22 = vector.shape_cast %21 : vector<16xf32> to vector<16x1xf32>
    %23 = tpu.iota {dimensions = array<i32: 1>} : vector<16x32xi32>
    %24 = vector.broadcast %4 : vector<16x1xi32> to vector<16x32xi32>
    %25 = arith.cmpi eq, %23, %24 : vector<16x32xi32>
    %cst_7 = arith.constant 0.000000e+00 : f32
    %26 = vector.broadcast %cst_7 : f32 to vector<16x32xf32>
    %27 = arith.select %25, %19, %26 : vector<16x32xi1>, vector<16x32xf32>
    %cst_8 = arith.constant dense<0.000000e+00> : vector<16xf32>
    %28 = vector.multi_reduction <add>, %27, %cst_8 [1] : vector<16x32xf32> to vector<16xf32>
    %29 = vector.shape_cast %28 : vector<16xf32> to vector<16x1xf32>
    %30 = math.log %22 : vector<16x1xf32>
    %31 = arith.subf %30, %29 : vector<16x1xf32>
    %c0_9 = arith.constant 0 : index
    %c0_10 = arith.constant 0 : index
    %c0_11 = arith.constant 0 : index
    %32 = vector.load %arg4[%c0_9, %c0_10, %c0_11] : memref<1x8x128xf32, #tpu.memory_space<vmem>>, vector<1x8x128xf32>
    %cst_12 = arith.constant 0.000000e+00 : f32
    %33 = vector.broadcast %cst_12 : f32 to vector<16x1xf32>
    %34 = arith.select %15, %31, %33 : vector<16x1xi1>, vector<16x1xf32>
    %35 = vector.shape_cast %34 : vector<16x1xf32> to vector<1x16x1xf32>
    %cst_13 = arith.constant dense<0.000000e+00> : vector<1xf32>
    %36 = vector.multi_reduction <add>, %35, %cst_13 [1, 2] : vector<1x16x1xf32> to vector<1xf32>
    %37 = vector.shape_cast %36 : vector<1xf32> to vector<1x1x1xf32>
    %38 = vector.extract %37[0, 0, 0] : f32 from vector<1x1x1xf32>
    %39 = vector.broadcast %38 : f32 to vector<1x8x128xf32>
    %40 = arith.addf %32, %39 : vector<1x8x128xf32>
    %c0_14 = arith.constant 0 : index
    %c0_15 = arith.constant 0 : index
    %c0_16 = arith.constant 0 : index
    %41 = vector.load %arg4[%c0_14, %c0_15, %c0_16] : memref<1x8x128xf32, #tpu.memory_space<vmem>>, vector<1x8x128xf32>
    tpu.vector_store %arg4[%c0_14, %c0_15, %c0_16], %40 {strides = array<i32>} : memref<1x8x128xf32, #tpu.memory_space<vmem>>, vector<1x8x128xf32>,
    %c0_17 = arith.constant 0 : index
    %c0_18 = arith.constant 0 : index
    %c0_19 = arith.constant 0 : index
    %42 = vector.load %arg5[%c0_17, %c0_18, %c0_19] : memref<1x8x128xf32, #tpu.memory_space<vmem>>, vector<1x8x128xf32>
    %43 = arith.extui %15 : vector<16x1xi1> to vector<16x1xi32>
    %44 = arith.sitofp %43 : vector<16x1xi32> to vector<16x1xf32>
    %45 = vector.shape_cast %44 : vector<16x1xf32> to vector<1x16x1xf32>
    %cst_20 = arith.constant dense<0.000000e+00> : vector<1xf32>
    %46 = vector.multi_reduction <add>, %45, %cst_20 [1, 2] : vector<1x16x1xf32> to vector<1xf32>
    %47 = vector.shape_cast %46 : vector<1xf32> to vector<1x1x1xf32>
    %48 = vector.extract %47[0, 0, 0] : f32 from vector<1x1x1xf32>
    %49 = vector.broadcast %48 : f32 to vector<1x8x128xf32>
    %50 = arith.addf %42, %49 : vector<1x8x128xf32>
    %c0_21 = arith.constant 0 : index
    %c0_22 = arith.constant 0 : index
    %c0_23 = arith.constant 0 : index
    %51 = vector.load %arg5[%c0_21, %c0_22, %c0_23] : memref<1x8x128xf32, #tpu.memory_space<vmem>>, vector<1x8x128xf32>
    tpu.vector_store %arg5[%c0_21, %c0_22, %c0_23], %50 {strides = array<i32>} : memref<1x8x128xf32, #tpu.memory_space<vmem>>, vector<1x8x128xf32>,
    return
  }
  func.func @transform_0(%arg0: i32, %arg1: i32) -> (i32, i32) {
    %c1_i32 = arith.constant 1 : i32
    %0 = arith.muli %arg0, %c1_i32 : i32
    %1 = arith.addi %0, %arg1 : i32
    %c0_i32 = arith.constant 0 : i32
    %2 = arith.minsi %1, %c0_i32 : i32
    %c0_i32_0 = arith.constant 0 : i32
    %c0_i32_1 = arith.constant 0 : i32
    return %2, %c0_i32_0 : i32, i32
  }
  func.func @transform_1(%arg0: i32, %arg1: i32) -> (i32, i32) {
    %c1_i32 = arith.constant 1 : i32
    %0 = arith.muli %arg0, %c1_i32 : i32
    %1 = arith.addi %0, %arg1 : i32
    %c0_i32 = arith.constant 0 : i32
    %2 = arith.minsi %1, %c0_i32 : i32
    %c0_i32_0 = arith.constant 0 : i32
    %c0_i32_1 = arith.constant 0 : i32
    return %2, %c0_i32_0 : i32, i32
  }
  func.func @transform_2(%arg0: i32, %arg1: i32) -> (i32, i32, i32) {
    %c0_i32 = arith.constant 0 : i32
    %c0_i32_0 = arith.constant 0 : i32
    %c0_i32_1 = arith.constant 0 : i32
    return %arg0, %c0_i32, %c0_i32_0 : i32, i32, i32
  }
  func.func @transform_3(%arg0: i32, %arg1: i32) -> (i32, i32, i32) {
    %c0_i32 = arith.constant 0 : i32
    %c0_i32_0 = arith.constant 0 : i32
    %c0_i32_1 = arith.constant 0 : i32
    return %arg0, %c0_i32, %c0_i32_0 : i32, i32, i32
  }
}

</mosaic_0001>

<llo_original>
// kernel: masked_cross_entropy_loss.1
$region0: #{masked_cross_entropy_loss.1}
  #allocation0 [shape = 'u32[]', space=smem, size = 0x4, offset = 0x4, fixed_abs, tag = 'smem constant byte address 0x4 - core index']
  #allocation1 [shape = 'u32[72,128]{1,0:T(1,128)}', space=vmem, size = 0x9000, scoped, tag = 'internal scratch']
  %s0 = inlined_call_operand.vmem [shape: f32[16,32], index: 0, kind: input, shape index: {}]
  %s1 = inlined_call_operand.vmem [shape: s32[16,1], index: 1, kind: input, shape index: {}]
  %s2 = inlined_call_operand.vmem [shape: f32[1,8,128], index: 2, kind: output, shape index: {0}]
  %s3 = inlined_call_operand.vmem [shape: f32[1,8,128], index: 3, kind: output, shape index: {1}]
  %4 = xla_tuple %s2, %s3
  %s5 = sld [smem:[#allocation0]]
  $region30: #{masked_cross_entropy_loss.1} parent=0
    _
  %s7 = ssub.s32 1, %s5
  %s8 = scalar_select 0, %s7, %s5
  // Predicated region
  $region2: #{masked_cross_entropy_loss.1} parent=0 // pred_check
    _
  $region3: #{masked_cross_entropy_loss.1} parent=0 // pred_check_branch
    %10 = sbr.rel (0) target = $region5
  $region4: #{masked_cross_entropy_loss.1} parent=0 // pred_region
    %s11 = sadd.s32 0, 0
    %p12 = scmp.lt.s32.totalorder %s11, 0
    %s13 = scalar_select %p12, %s11, 0
    %s14 = smul.u32 2, %s13
    %p15 = scmp.lt.s32.totalorder %s14, 1
    %s16 = scalar_select %p15, %s14, 1
    %s17 = smul.addr %s16, 8
    %s18 = scalar_lea.vmem %s0, %s17
    %s19 = sadd.s32 0, 0
    %p20 = scmp.lt.s32.totalorder %s19, 0
    %s21 = scalar_select %p20, %s19, 0
    %s22 = smul.u32 2, %s21
  $region5: #{masked_cross_entropy_loss.1} parent=0 // pred_fallthru
    _
  // Predicated region
  $region6: #{masked_cross_entropy_loss.1} parent=0 // pred_check
    _
  $region7: #{masked_cross_entropy_loss.1} parent=0 // pred_check_branch
    %24 = sbr.rel (0) target = $region9
  $region8: #{masked_cross_entropy_loss.1} parent=0 // pred_region
    %s25 = sadd.s32 0, 0
    %p26 = scmp.lt.s32.totalorder %s25, 0
    %s27 = scalar_select %p26, %s25, 0
    %s28 = smul.u32 2, %s27
    %p29 = scmp.lt.s32.totalorder %s28, 1
    %s30 = scalar_select %p29, %s28, 1
    %s31 = smul.addr %s30, 8
    %s32 = scalar_lea.vmem %s1, %s31
    %s33 = sadd.s32 0, 0
    %p34 = scmp.lt.s32.totalorder %s33, 0
    %s35 = scalar_select %p34, %s33, 0
    %s36 = smul.u32 2, %s35
  $region9: #{masked_cross_entropy_loss.1} parent=0 // pred_fallthru
    _
  %s37 = sadd.s32 0, 0
  %p38 = scmp.lt.s32.totalorder %s37, 0
  %s39 = scalar_select %p38, %s37, 0
  %s40 = smul.u32 2, %s39
  %p41 = scmp.lt.s32.totalorder %s40, 1
  %s42 = scalar_select %p41, %s40, 1
  %s43 = smul.addr %s42, 8
  %s44 = scalar_lea.vmem %s0, %s43
  %s45 = sadd.s32 0, 0
  %p46 = scmp.lt.s32.totalorder %s45, 0
  %s47 = scalar_select %p46, %s45, 0
  %s48 = smul.u32 2, %s47
  %p49 = scmp.lt.s32.totalorder %s48, 1
  %s50 = scalar_select %p49, %s48, 1
  %s51 = smul.addr %s50, 8
  %s52 = scalar_lea.vmem %s1, %s51
  %s53 = sadd.s32 0, 0
  %p54 = scmp.lt.s32.totalorder %s53, 0
  %s55 = scalar_select %p54, %s53, 0
  %s56 = smul.u32 2, %s55
  %p57 = scmp.lt.s32.totalorder %s56, 1
  %s58 = scalar_select %p57, %s56, 1
  %s59 = smul.addr %s58, 8
  %s60 = scalar_lea.vmem %s0, %s59
  %s61 = sadd.s32 0, 0
  %p62 = scmp.lt.s32.totalorder %s61, 0
  %s63 = scalar_select %p62, %s61, 0
  %s64 = smul.u32 2, %s63
  %s65 = sadd.s32 0, 0
  %p66 = scmp.lt.s32.totalorder %s65, 0
  %s67 = scalar_select %p66, %s65, 0
  %s68 = smul.u32 2, %s67
  %p69 = scmp.lt.s32.totalorder %s68, 1
  %s70 = scalar_select %p69, %s68, 1
  %s71 = smul.addr %s70, 8
  %s72 = scalar_lea.vmem %s1, %s71
  %s73 = sadd.s32 0, 0
  %p74 = scmp.lt.s32.totalorder %s73, 0
  %s75 = scalar_select %p74, %s73, 0
  %s76 = smul.u32 2, %s75
  %p77 = scmp.eq.s32.totalorder 0, 0
  // Predicated region
  $region10: #{masked_cross_entropy_loss.1} parent=0 // pred_check
    %p78 = pneg %p77
  $region11: #{masked_cross_entropy_loss.1} parent=0 // pred_check_branch
    %80 = sbr.rel (%p78) target = $region13
  $region12: #{masked_cross_entropy_loss.1} parent=0 // pred_region
    %81 = vst [vmem:[%s2] sm:$0xff] 0.0
    %82 = vst [vmem:[%s3] sm:$0xff] 0.0
  $region13: #{masked_cross_entropy_loss.1} parent=0 // pred_fallthru
    _
  %v83 = vld [vmem:[%s60] sm:$0xff]
  %v84 = vld [vmem:[%s60 + $0x8] sm:$0xff]
  %v85 = vld [vmem:[%s72] sm:$0xff]
  %v86 = vld [vmem:[%s72 + $0x8] sm:$0xff]
  %s87 = sadd.s32 0, 0
  %v88 = vlaneseq
  %v89 = vshrl.u32 %v88, 7
  %v90 = vadd.s32 %v89, 8
  %s91 = smul.u32 %s87, 16
  %v92 = vstv %s91
  %v93 = vadd.s32 %v92, %v89
  %v94 = vadd.s32 %v92, %v90
  %vm95 = vcmp.lt.s32.totalorder %v93, 16
  %vm96 = vcmp.lt.s32.totalorder %v94, 16
  %vm97 = vcmp.ge.s32.totalorder %v85, 0
  %vm98 = vcmp.ge.s32.totalorder %v86, 0
  %vm99 = vmand %vm97, %vm95
  %vm100 = vmand %vm98, %vm96
  %vm101 = vcmask 261120
  %v102 = vsel %vm101, %v83, -inf
  %103 = vmax.xlane.f32.xlu0 %v102
  %v104 = vpop.xlane.xlu0 %103
  %v105 = vsel %vm101, %v84, -inf
  %106 = vmax.xlane.f32.xlu0 %v105
  %v107 = vpop.xlane.xlu0 %106
  %v108 = vsub.f32 %v83, %v104
  %v109 = vsub.f32 %v84, %v107
  %v110 = vmul.f32 %v108, 1.442695
  %v111 = vpow.pop %v110
  %v112 = vmul.f32 %v109, 1.442695
  %v113 = vpow.pop %v112
  %v114 = vsel %vm101, %v111, 0.0
  %115 = vadd.xlane.f32.xlu0 %v114
  %v116 = vpop.xlane.xlu0 %115
  %v117 = vsel %vm101, %v113, 0.0
  %118 = vadd.xlane.f32.xlu0 %v117
  %v119 = vpop.xlane.xlu0 %118
  %v120 = vlaneseq
  %v121 = vand.u32 %v120, 127
  %122 = vset.pattern.permute.xlu0 0
  %123 = vperm.xlu0 %122, %v85
  %v124 = vpop.permute.xlu0 %123
  %125 = vset.pattern.permute.xlu0 0
  %126 = vperm.xlu0 %125, %v86
  %v127 = vpop.permute.xlu0 %126
  %vm128 = vcmp.eq.s32.totalorder %v121, %v124
  %vm129 = vcmp.eq.s32.totalorder %v121, %v127
  %v130 = vsel %vm128, %v108, 0.0
  %v131 = vsel %vm129, %v109, 0.0
  %v132 = vsel %vm101, %v130, 0.0
  %133 = vadd.xlane.f32.xlu0 %v132
  %v134 = vpop.xlane.xlu0 %133
  %v135 = vsel %vm101, %v131, 0.0
  %136 = vadd.xlane.f32.xlu0 %v135
  %v137 = vpop.xlane.xlu0 %136
  %v138 = vlog2.pop %v116
  %v139 = vmul.f32 %v138, 0.6931472
  %v140 = vlog2.pop %v119
  %v141 = vmul.f32 %v140, 0.6931472
  %v142 = vsub.f32 %v139, %v134
  %v143 = vsub.f32 %v141, %v137
  %v144 = vld [vmem:[%s2] sm:$0xff]
  %v145 = vsel %vm99, %v142, 0.0
  %v146 = vsel %vm100, %v143, 0.0
  %vm147 = vcmask 7168
  %v148 = vsel %vm147, %v145, 0.0
  %v149 = vsel %vm147, %v146, 0.0
  %v150 = vadd.f32 %v148, %v149
  %151 = vadd.xlane.f32.xlu0 %v150
  %v152 = vpop.xlane.xlu0 %151
  %v153 = vrot.slane %v152, 4
  %v154 = vadd.f32 %v152, %v153
  %v155 = vrot.slane %v154, 2
  %v156 = vadd.f32 %v154, %v155
  %v157 = vrot.slane %v156, 1
  %v158 = vadd.f32 %v156, %v157
  %s159 = vtos %v158
  %v160 = vstv %s159
  %v161 = vadd.f32 %v144, %v160
  %162 = vst [vmem:[%s2] sm:$0xff] %v161
  %v163 = vld [vmem:[%s3] sm:$0xff]
  %v164 = vsel %vm99, 1, 0
  %v165 = vsel %vm100, 1, 0
  %v166 = vcvt.s32.f32 %v164
  %v167 = vcvt.s32.f32 %v165
  %v168 = vsel %vm147, %v166, 0.0
  %v169 = vsel %vm147, %v167, 0.0
  %v170 = vadd.f32 %v168, %v169
  %171 = vadd.xlane.f32.xlu0 %v170
  %v172 = vpop.xlane.xlu0 %171
  %v173 = vrot.slane %v172, 4
  %v174 = vadd.f32 %v172, %v173
  %v175 = vrot.slane %v174, 2
  %v176 = vadd.f32 %v174, %v175
  %v177 = vrot.slane %v176, 1
  %v178 = vadd.f32 %v176, %v177
  %s179 = vtos %v178
  %v180 = vstv %s179
  %v181 = vadd.f32 %v163, %v180
  %182 = vst [vmem:[%s3] sm:$0xff] %v181
  // Predicated region
  $region14: #{masked_cross_entropy_loss.1} parent=0 // pred_check
    _
  $region15: #{masked_cross_entropy_loss.1} parent=0 // pred_check_branch
    %184 = sbr.rel (0) target = $region17
  $region16: #{masked_cross_entropy_loss.1} parent=0 // pred_region
    _
  $region17: #{masked_cross_entropy_loss.1} parent=0 // pred_fallthru
    _
  // Predicated region
  $region18: #{masked_cross_entropy_loss.1} parent=0 // pred_check
    _
  $region19: #{masked_cross_entropy_loss.1} parent=0 // pred_check_branch
    %186 = sbr.rel (0) target = $region21
  $region20: #{masked_cross_entropy_loss.1} parent=0 // pred_region
    _
  $region21: #{masked_cross_entropy_loss.1} parent=0 // pred_fallthru
    _
  // Predicated region
  $region22: #{masked_cross_entropy_loss.1} parent=0 // pred_check
    _
  $region23: #{masked_cross_entropy_loss.1} parent=0 // pred_check_branch
    %188 = sbr.rel (0) target = $region25
  $region24: #{masked_cross_entropy_loss.1} parent=0 // pred_region
    _
  $region25: #{masked_cross_entropy_loss.1} parent=0 // pred_fallthru
    _
  // Predicated region
  $region26: #{masked_cross_entropy_loss.1} parent=0 // pred_check
    _
  $region27: #{masked_cross_entropy_loss.1} parent=0 // pred_check_branch
    %190 = sbr.rel (0) target = $region29
  $region28: #{masked_cross_entropy_loss.1} parent=0 // pred_region
    _
  $region29: #{masked_cross_entropy_loss.1} parent=0 // pred_fallthru
    _

</llo_original>
